<compile_context>
chip_gen: v7x
topology: tpu7x:2x2x1
jax: 0.10.0
libtpu: 0.0.40
codegen_flags: <defaults>
</compile_context>

<pallas_src>
import jax
import jax.numpy as jnp
from jax import lax
from jax.experimental import pallas as pl
from jax.experimental.pallas import tpu as pltpu


def _round_up(v, m):
    return ((v + m - 1) // m) * m


def _dropout_bits(seed_u32, tile_u32, shape):
    """Stateless murmur-style hash -> uint32 bits.

    Computed ONCE per batch tile; hidden layer l uses bit l of the result as its
    Bernoulli(0.5) coin, so the per-element integer-multiply chain is amortized
    over all hidden layers.
    """
    rows = lax.broadcasted_iota(jnp.uint32, shape, 0)
    cols = lax.broadcasted_iota(jnp.uint32, shape, 1)
    h = (seed_u32 * jnp.uint32(0x85EBCA6B)
         + tile_u32 * jnp.uint32(0xC2B2AE35)
         + rows * jnp.uint32(0x27D4EB2F)
         + cols * jnp.uint32(0x165667B1))
    h = h ^ (h >> 16)
    h = h * jnp.uint32(0x85EBCA6B)
    h = h ^ (h >> 13)
    h = h * jnp.uint32(0xC2B2AE35)
    h = h ^ (h >> 16)
    return h


def _make_deep_nn_kernel(nb_layers, pdims, tb, use_hw_prng):
    """Fused MLP over one batch tile.  Weights stay VMEM-resident."""
    n_hidden = nb_layers - 1
    max_hid_pad = max(pdims[1:nb_layers]) if n_hidden > 0 else 0
    # TODO(synk): with > 32 hidden layers the bit-per-layer coin would repeat;
    # re-hash per group of 32 layers in that (unlikely) regime.

    def kernel(seed_ref, *refs):
        # refs = (x, w_0, ..., w_{L-1}, packed_bias, out)
        x_ref = refs[0]
        w_refs = refs[1:1 + nb_layers]          # (in_pad, out_pad) bf16 (== torch W.T)
        bias_ref = refs[1 + nb_layers]          # (nb_layers, max_out_pad) f32
        o_ref = refs[-1]

        if n_hidden > 0:
            if use_hw_prng:
                pltpu.prng_seed(seed_ref[0] + pl.program_id(0))
                bits = pltpu.bitcast(
                    pltpu.prng_random_bits((tb, max_hid_pad)), jnp.uint32)
            else:
                seed_u32 = seed_ref[0].astype(jnp.uint32)
                tile_u32 = pl.program_id(0).astype(jnp.uint32)
                bits = _dropout_bits(seed_u32, tile_u32, (tb, max_hid_pad))

        act = x_ref[...]                        # bf16 activations of the input layer
        for l in range(nb_layers):
            po = pdims[l + 1]
            # Linear on the MXU: bf16 x bf16 -> f32 accumulate; f32 bias add.
            act32 = (jnp.dot(act.astype(jnp.bfloat16), w_refs[l][...],
                             preferred_element_type=jnp.float32)
                     + bias_ref[l:l + 1, :po])
            if l < n_hidden:
                # Fused ReLU + Dropout(0.5): keep iff x > 0 and coin bit == 0;
                # kept values scaled by 1/(1-p) = 2.
                coin = ((bits[:, :po] >> (l % 32)) & jnp.uint32(1)) == jnp.uint32(0)
                act = jnp.where(jnp.logical_and(act32 > 0.0, coin),
                                act32 * 2.0, 0.0)
            else:
                act = act32

        o_ref[...] = act.astype(o_ref.dtype)

    return kernel


def prepare_deep_nn_params(weights, biases):
    """Pad feature dims to lane-dense multiples of 128, cast weights to bf16 once,
    and pack all biases into one (nb_layers, max_out_pad) f32 operand.  Hoisted out
    of the forward so repeated calls don't re-materialize padded copies in HBM."""
    nb_layers = len(weights)
    dims = [weights[0].shape[0]] + [w.shape[1] for w in weights]
    pdims = [_round_up(d, 128) for d in dims]

    w_pads = []
    for l, w in enumerate(weights):
        wp = jnp.zeros((pdims[l], pdims[l + 1]), jnp.bfloat16)
        wp = wp.at[:dims[l], :dims[l + 1]].set(w.astype(jnp.bfloat16))
        w_pads.append(wp)

    max_po = max(pdims[1:])
    b_pack = jnp.zeros((nb_layers, max_po), jnp.float32)
    for l, b in enumerate(biases):
        b_pack = b_pack.at[l, :dims[l + 1]].set(b.astype(jnp.float32))

    return {"weights": w_pads, "biases": b_pack, "dims": dims, "pdims": pdims}


def _vmem_limit_bytes(nb_layers, pdims, tb, max_po):
    # Single-buffered resident weights/biases + double-buffered activation tiles
    # + f32 working intermediates + slack for compiler-internal scratch.
    w_bytes = sum(pdims[l] * pdims[l + 1] * 2 for l in range(nb_layers))
    b_bytes = nb_layers * max_po * 4
    act_io = 2 * tb * pdims[0] * 2 + 2 * tb * pdims[-1] * 4
    work = tb * max(pdims) * 16
    needed = w_bytes + b_bytes + act_io + work + (4 << 20)

    try:
        info = pltpu.get_tpu_info()
        phys = int(getattr(info, "vmem_capacity_bytes", 0)) or (64 << 20)
    except Exception:
        phys = 64 << 20                 # conservative: v7x physical VMEM
    # ~20% headroom for pipeline buffers / internal scratch:
    #   v7x  (64 MiB physical)  -> ~51 MiB cap
    #   v5e/v6e (128 MiB)       -> ~102 MiB cap
    cap = max(int(phys * 0.8), 32 << 20)
    # TODO(synk): if the resident weight stack alone exceeds `cap` (very wide
    # hidden layers), tile the large layers' reduction axis instead of keeping
    # the whole stack VMEM-resident.
    return int(min(max(needed, 32 << 20), cap))


def _build_forward(nb_layers, pdims, tb, b_pad, max_po, vmem_limit,
                   use_hw_prng, single_buffer_weights):
    resident_kw = {}
    if single_buffer_weights:
        # Grid-invariant operands: one buffer instead of the default two.
        resident_kw = {"pipeline_mode": pl.Buffered(1)}

    in_specs = [pl.BlockSpec((tb, pdims[0]), lambda i, *_: (i, 0))]
    for l in range(nb_layers):
        in_specs.append(pl.BlockSpec((pdims[l], pdims[l + 1]),
                                     lambda i, *_: (0, 0), **resident_kw))
    in_specs.append(pl.BlockSpec((nb_layers, max_po),
                                 lambda i, *_: (0, 0), **resident_kw))
    out_specs = pl.BlockSpec((tb, pdims[-1]), lambda i, *_: (i, 0))

    return pl.pallas_call(
        _make_deep_nn_kernel(nb_layers, pdims, tb, use_hw_prng),
        out_shape=jax.ShapeDtypeStruct((b_pad, pdims[-1]), jnp.float32),
        grid_spec=pltpu.PrefetchScalarGridSpec(
            num_scalar_prefetch=1,               # dropout seed lands in SMEM
            grid=(b_pad // tb,),
            in_specs=in_specs,
            out_specs=out_specs,
        ),
        compiler_params=pltpu.CompilerParams(
            dimension_semantics=("parallel",),   # shard batch tiles across TCs
            vmem_limit_bytes=vmem_limit,
        ),
    )


def deep_nn_forward(x, params, seed, *, batch_tile=256, use_hw_prng=False):
    """Fused DeepNN forward in one pallas_call.

    Args:
      x:      (batch, layers_l[0]) float32 activations.
      params: output of prepare_deep_nn_params (padded bf16 weights, packed f32 biases).
      seed:   (1,) int32 dropout seed.
    """
    weights, biases = params["weights"], params["biases"]
    dims, pdims = params["dims"], params["pdims"]
    nb_layers = len(weights)
    batch = x.shape[0]
    max_po = biases.shape[1]

    # Batch tile: multiple of 16 (bf16 sublane packing); chosen so batches > 16
    # rows produce >= 2 grid steps (engages both TCs on v7x), capped at batch_tile.
    tb = max(16, min(batch_tile, _round_up(max(batch // 2, 1), 16)))
    b_pad = _round_up(batch, tb)

    # Zero-pad the input (rows + lane-dense feature width); padded rows/cols do
    # not change the math on the real slice and are cut off below.
    x_p = jnp.zeros((b_pad, pdims[0]), jnp.bfloat16)
    x_p = x_p.at[:batch, :dims[0]].set(x.astype(jnp.bfloat16))

    vmem_limit = _vmem_limit_bytes(nb_layers, pdims, tb, max_po)
    inputs = [seed, x_p] + list(weights) + [biases]

    try:
        fwd = _build_forward(nb_layers, pdims, tb, b_pad, max_po, vmem_limit,
                             use_hw_prng, single_buffer_weights=True)
        out = fwd(*inputs)
    except Exception:
        # Fallback for jax builds without BlockSpec(pipeline_mode=...) support.
        fwd = _build_forward(nb_layers, pdims, tb, b_pad, max_po, vmem_limit,
                             use_hw_prng, single_buffer_weights=False)
        out = fwd(*inputs)

    return out[:batch, :dims[-1]]


def init_deep_nn_params(key, layers_l):
    """torch.nn.Linear default init: U(-1/sqrt(in), 1/sqrt(in)); W stored as (in, out)."""
    weights, biases = [], []
    for in_dim, out_dim in zip(layers_l, layers_l[1:]):
        key, kw, kb = jax.random.split(key, 3)
        bound = 1.0 / jnp.sqrt(jnp.float32(in_dim))
        w = jax.random.uniform(kw, (in_dim, out_dim), jnp.float32,
                               minval=-bound, maxval=bound)
        b = jax.random.uniform(kb, (out_dim,), jnp.float32,
                               minval=-bound, maxval=bound)
        weights.append(w)
        biases.append(b)
    return weights, biases


if __name__ == "__main__":
    # DeepNN([32, 64, 64, 8]) — 2 hidden layers of 64 neurons.
    layers_l = [32, 64, 64, 8]
    batch = 8

    key = jax.random.PRNGKey(0)
    key, kx = jax.random.split(key)
    x = jax.random.normal(kx, (batch, layers_l[0]), jnp.float32)

    weights, biases = init_deep_nn_params(key, layers_l)
    params = prepare_deep_nn_params(weights, biases)   # pad/cast/pack ONCE
    seed = jnp.array([1234], dtype=jnp.int32)

    out = deep_nn_forward(x, params, seed)
    out = jax.block_until_ready(out)

    assert out.shape == (batch, layers_l[-1])
    assert out.dtype == jnp.float32
    print("KERNEL_OK")
</pallas_src>

<mosaic_0001>
module attributes {stable_mosaic.version = 11 : i64} {
  func.func @kernel(%arg0: i32, %arg1: memref<1xi32, #tpu.memory_space<smem>>, %arg2: memref<16x128xbf16, #tpu.memory_space<vmem>>, %arg3: memref<128x128xbf16, #tpu.memory_space<vmem>>, %arg4: memref<128x128xbf16, #tpu.memory_space<vmem>>, %arg5: memref<128x128xbf16, #tpu.memory_space<vmem>>, %arg6: memref<3x128xf32, #tpu.memory_space<vmem>>, %arg7: memref<16x128xf32, #tpu.memory_space<vmem>>) attributes {dimension_semantics = [#tpu.dimension_semantics<parallel>], iteration_bounds = array<i64: 1>, scalar_prefetch = 1 : i64, scratch_operands = 0 : i64, tpu.core_type = #tpu.core_type<tc>, window_params = [{transform_indices = @transform_0, window_bounds = array<i64: 16, 128>}, {pipeline_mode = #tpu.pipeline_mode<synchronous>, transform_indices = @transform_1, window_bounds = array<i64: 128, 128>}, {pipeline_mode = #tpu.pipeline_mode<synchronous>, transform_indices = @transform_2, window_bounds = array<i64: 128, 128>}, {pipeline_mode = #tpu.pipeline_mode<synchronous>, transform_indices = @transform_3, window_bounds = array<i64: 128, 128>}, {pipeline_mode = #tpu.pipeline_mode<synchronous>, transform_indices = @transform_4, window_bounds = array<i64: 3, 128>}, {transform_indices = @transform_5, window_bounds = array<i64: 16, 128>}]} {
    %c0 = arith.constant 0 : index
    %0 = memref.load %arg1[%c0] : memref<1xi32, #tpu.memory_space<smem>>
    %1 = tpu.iota {dimensions = array<i32: 0>} : vector<16x128xi32>
    %2 = tpu.iota {dimensions = array<i32: 1>} : vector<16x128xi32>
    %c-2048144789_i32 = arith.constant -2048144789 : i32
    %3 = arith.muli %0, %c-2048144789_i32 : i32
    %c-1028477387_i32 = arith.constant -1028477387 : i32
    %4 = arith.muli %arg0, %c-1028477387_i32 : i32
    %5 = arith.addi %3, %4 : i32
    %c668265263_i32 = arith.constant 668265263 : i32
    %6 = vector.broadcast %c668265263_i32 : i32 to vector<16x128xi32>
    %7 = arith.muli %1, %6 : vector<16x128xi32>
    %8 = vector.broadcast %5 : i32 to vector<16x128xi32>
    %9 = arith.addi %8, %7 : vector<16x128xi32>
    %c374761393_i32 = arith.constant 374761393 : i32
    %10 = vector.broadcast %c374761393_i32 : i32 to vector<16x128xi32>
    %11 = arith.muli %2, %10 : vector<16x128xi32>
    %12 = arith.addi %9, %11 : vector<16x128xi32>
    %c16_i32 = arith.constant 16 : i32
    %13 = vector.broadcast %c16_i32 : i32 to vector<16x128xi32>
    %14 = arith.shrui %12, %13 : vector<16x128xi32>
    %15 = arith.xori %12, %14 : vector<16x128xi32>
    %c-2048144789_i32_0 = arith.constant -2048144789 : i32
    %16 = vector.broadcast %c-2048144789_i32_0 : i32 to vector<16x128xi32>
    %17 = arith.muli %15, %16 : vector<16x128xi32>
    %c13_i32 = arith.constant 13 : i32
    %18 = vector.broadcast %c13_i32 : i32 to vector<16x128xi32>
    %19 = arith.shrui %17, %18 : vector<16x128xi32>
    %20 = arith.xori %17, %19 : vector<16x128xi32>
    %c-1028477387_i32_1 = arith.constant -1028477387 : i32
    %21 = vector.broadcast %c-1028477387_i32_1 : i32 to vector<16x128xi32>
    %22 = arith.muli %20, %21 : vector<16x128xi32>
    %c16_i32_2 = arith.constant 16 : i32
    %23 = vector.broadcast %c16_i32_2 : i32 to vector<16x128xi32>
    %24 = arith.shrui %22, %23 : vector<16x128xi32>
    %25 = arith.xori %22, %24 : vector<16x128xi32>
    %c0_3 = arith.constant 0 : index
    %c0_4 = arith.constant 0 : index
    %26 = vector.load %arg2[%c0_3, %c0_4] : memref<16x128xbf16, #tpu.memory_space<vmem>>, vector<16x128xbf16>
    %c0_5 = arith.constant 0 : index
    %c0_6 = arith.constant 0 : index
    %27 = vector.load %arg3[%c0_5, %c0_6] : memref<128x128xbf16, #tpu.memory_space<vmem>>, vector<128x128xbf16>
    %cst = arith.constant dense<0.000000e+00> : vector<16x128xf32>
    %28 = tpu.matmul %26, %27, %cst {dimension_numbers = #tpu.dot_dimension_numbers<[1], [0], [0], [1], [0, 0, 1, 1], [], []>} : vector<16x128xbf16>, vector<128x128xbf16>, vector<16x128xf32> -> vector<16x128xf32>
    %c0_7 = arith.constant 0 : index
    %c0_8 = arith.constant 0 : index
    %29 = vector.load %arg6[%c0_7, %c0_8] : memref<3x128xf32, #tpu.memory_space<vmem>>, vector<1x128xf32>
    %30 = vector.broadcast %29 : vector<1x128xf32> to vector<16x128xf32>
    %31 = arith.addf %28, %30 : vector<16x128xf32>
    %c0_i32 = arith.constant 0 : i32
    %32 = vector.broadcast %c0_i32 : i32 to vector<16x128xi32>
    %33 = arith.shrui %25, %32 : vector<16x128xi32>
    %c1_i32 = arith.constant 1 : i32
    %34 = vector.broadcast %c1_i32 : i32 to vector<16x128xi32>
    %35 = arith.andi %33, %34 : vector<16x128xi32>
    %c0_i32_9 = arith.constant 0 : i32
    %36 = vector.broadcast %c0_i32_9 : i32 to vector<16x128xi32>
    %37 = arith.cmpi eq, %35, %36 : vector<16x128xi32>
    %cst_10 = arith.constant 0.000000e+00 : f32
    %38 = vector.broadcast %cst_10 : f32 to vector<16x128xf32>
    %39 = arith.cmpf ogt, %31, %38 : vector<16x128xf32>
    %40 = arith.andi %39, %37 : vector<16x128xi1>
    %cst_11 = arith.constant 2.000000e+00 : f32
    %41 = vector.broadcast %cst_11 : f32 to vector<16x128xf32>
    %42 = arith.mulf %31, %41 : vector<16x128xf32>
    %cst_12 = arith.constant 0.000000e+00 : f32
    %43 = vector.broadcast %cst_12 : f32 to vector<16x128xf32>
    %44 = arith.select %40, %42, %43 : vector<16x128xi1>, vector<16x128xf32>
    %45 = arith.truncf %44 : vector<16x128xf32> to vector<16x128xbf16>
    %c0_13 = arith.constant 0 : index
    %c0_14 = arith.constant 0 : index
    %46 = vector.load %arg4[%c0_13, %c0_14] : memref<128x128xbf16, #tpu.memory_space<vmem>>, vector<128x128xbf16>
    %cst_15 = arith.constant dense<0.000000e+00> : vector<16x128xf32>
    %47 = tpu.matmul %45, %46, %cst_15 {dimension_numbers = #tpu.dot_dimension_numbers<[1], [0], [0], [1], [0, 0, 1, 1], [], []>} : vector<16x128xbf16>, vector<128x128xbf16>, vector<16x128xf32> -> vector<16x128xf32>
    %c1 = arith.constant 1 : index
    %c0_16 = arith.constant 0 : index
    %48 = vector.load %arg6[%c1, %c0_16] : memref<3x128xf32, #tpu.memory_space<vmem>>, vector<1x128xf32>
    %49 = vector.broadcast %48 : vector<1x128xf32> to vector<16x128xf32>
    %50 = arith.addf %47, %49 : vector<16x128xf32>
    %c1_i32_17 = arith.constant 1 : i32
    %51 = vector.broadcast %c1_i32_17 : i32 to vector<16x128xi32>
    %52 = arith.shrui %25, %51 : vector<16x128xi32>
    %c1_i32_18 = arith.constant 1 : i32
    %53 = vector.broadcast %c1_i32_18 : i32 to vector<16x128xi32>
    %54 = arith.andi %52, %53 : vector<16x128xi32>
    %c0_i32_19 = arith.constant 0 : i32
    %55 = vector.broadcast %c0_i32_19 : i32 to vector<16x128xi32>
    %56 = arith.cmpi eq, %54, %55 : vector<16x128xi32>
    %cst_20 = arith.constant 0.000000e+00 : f32
    %57 = vector.broadcast %cst_20 : f32 to vector<16x128xf32>
    %58 = arith.cmpf ogt, %50, %57 : vector<16x128xf32>
    %59 = arith.andi %58, %56 : vector<16x128xi1>
    %cst_21 = arith.constant 2.000000e+00 : f32
    %60 = vector.broadcast %cst_21 : f32 to vector<16x128xf32>
    %61 = arith.mulf %50, %60 : vector<16x128xf32>
    %cst_22 = arith.constant 0.000000e+00 : f32
    %62 = vector.broadcast %cst_22 : f32 to vector<16x128xf32>
    %63 = arith.select %59, %61, %62 : vector<16x128xi1>, vector<16x128xf32>
    %64 = arith.truncf %63 : vector<16x128xf32> to vector<16x128xbf16>
    %c0_23 = arith.constant 0 : index
    %c0_24 = arith.constant 0 : index
    %65 = vector.load %arg5[%c0_23, %c0_24] : memref<128x128xbf16, #tpu.memory_space<vmem>>, vector<128x128xbf16>
    %cst_25 = arith.constant dense<0.000000e+00> : vector<16x128xf32>
    %66 = tpu.matmul %64, %65, %cst_25 {dimension_numbers = #tpu.dot_dimension_numbers<[1], [0], [0], [1], [0, 0, 1, 1], [], []>} : vector<16x128xbf16>, vector<128x128xbf16>, vector<16x128xf32> -> vector<16x128xf32>
    %c2 = arith.constant 2 : index
    %c0_26 = arith.constant 0 : index
    %67 = vector.load %arg6[%c2, %c0_26] : memref<3x128xf32, #tpu.memory_space<vmem>>, vector<1x128xf32>
    %68 = vector.broadcast %67 : vector<1x128xf32> to vector<16x128xf32>
    %69 = arith.addf %66, %68 : vector<16x128xf32>
    %c0_27 = arith.constant 0 : index
    %c0_28 = arith.constant 0 : index
    %70 = vector.load %arg7[%c0_27, %c0_28] : memref<16x128xf32, #tpu.memory_space<vmem>>, vector<16x128xf32>
    tpu.vector_store %arg7[%c0_27, %c0_28], %69 {strides = array<i32>} : memref<16x128xf32, #tpu.memory_space<vmem>>, vector<16x128xf32>,
    return
  }
  func.func @transform_0(%arg0: i32, %arg1: memref<1xi32, #tpu.memory_space<smem>>) -> (i32, i32) {
    %c0_i32 = arith.constant 0 : i32
    %c0_i32_0 = arith.constant 0 : i32
    return %arg0, %c0_i32 : i32, i32
  }
  func.func @transform_1(%arg0: i32, %arg1: memref<1xi32, #tpu.memory_space<smem>>) -> (i32, i32) {
    %c0_i32 = arith.constant 0 : i32
    %c0_i32_0 = arith.constant 0 : i32
    %c0_i32_1 = arith.constant 0 : i32
    return %c0_i32, %c0_i32_0 : i32, i32
  }
  func.func @transform_2(%arg0: i32, %arg1: memref<1xi32, #tpu.memory_space<smem>>) -> (i32, i32) {
    %c0_i32 = arith.constant 0 : i32
    %c0_i32_0 = arith.constant 0 : i32
    %c0_i32_1 = arith.constant 0 : i32
    return %c0_i32, %c0_i32_0 : i32, i32
  }
  func.func @transform_3(%arg0: i32, %arg1: memref<1xi32, #tpu.memory_space<smem>>) -> (i32, i32) {
    %c0_i32 = arith.constant 0 : i32
    %c0_i32_0 = arith.constant 0 : i32
    %c0_i32_1 = arith.constant 0 : i32
    return %c0_i32, %c0_i32_0 : i32, i32
  }
  func.func @transform_4(%arg0: i32, %arg1: memref<1xi32, #tpu.memory_space<smem>>) -> (i32, i32) {
    %c0_i32 = arith.constant 0 : i32
    %c0_i32_0 = arith.constant 0 : i32
    %c0_i32_1 = arith.constant 0 : i32
    return %c0_i32, %c0_i32_0 : i32, i32
  }
  func.func @transform_5(%arg0: i32, %arg1: memref<1xi32, #tpu.memory_space<smem>>) -> (i32, i32) {
    %c0_i32 = arith.constant 0 : i32
    %c0_i32_0 = arith.constant 0 : i32
    return %arg0, %c0_i32 : i32, i32
  }
}

module attributes {stable_mosaic.version = 11 : i64} {
  func.func @kernel(%arg0: i32, %arg1: memref<1xi32, #tpu.memory_space<smem>>, %arg2: memref<16x128xbf16, #tpu.memory_space<vmem>>, %arg3: memref<128x128xbf16, #tpu.memory_space<vmem>>, %arg4: memref<128x128xbf16, #tpu.memory_space<vmem>>, %arg5: memref<128x128xbf16, #tpu.memory_space<vmem>>, %arg6: memref<3x128xf32, #tpu.memory_space<vmem>>, %arg7: memref<16x128xf32, #tpu.memory_space<vmem>>) attributes {dimension_semantics = [#tpu.dimension_semantics<parallel>], iteration_bounds = array<i64: 1>, scalar_prefetch = 1 : i64, scratch_operands = 0 : i64, tpu.core_type = #tpu.core_type<tc>, window_params = [{transform_indices = @transform_0, window_bounds = array<i64: 16, 128>}, {pipeline_mode = #tpu.pipeline_mode<synchronous>, transform_indices = @transform_1, window_bounds = array<i64: 128, 128>}, {pipeline_mode = #tpu.pipeline_mode<synchronous>, transform_indices = @transform_2, window_bounds = array<i64: 128, 128>}, {pipeline_mode = #tpu.pipeline_mode<synchronous>, transform_indices = @transform_3, window_bounds = array<i64: 128, 128>}, {pipeline_mode = #tpu.pipeline_mode<synchronous>, transform_indices = @transform_4, window_bounds = array<i64: 3, 128>}, {transform_indices = @transform_5, window_bounds = array<i64: 16, 128>}]} {
    %c0 = arith.constant 0 : index
    %0 = memref.load %arg1[%c0] : memref<1xi32, #tpu.memory_space<smem>>
    %1 = tpu.iota {dimensions = array<i32: 0>} : vector<16x128xi32>
    %2 = tpu.iota {dimensions = array<i32: 1>} : vector<16x128xi32>
    %c-2048144789_i32 = arith.constant -2048144789 : i32
    %3 = arith.muli %0, %c-2048144789_i32 : i32
    %c-1028477387_i32 = arith.constant -1028477387 : i32
    %4 = arith.muli %arg0, %c-1028477387_i32 : i32
    %5 = arith.addi %3, %4 : i32
    %c668265263_i32 = arith.constant 668265263 : i32
    %6 = vector.broadcast %c668265263_i32 : i32 to vector<16x128xi32>
    %7 = arith.muli %1, %6 : vector<16x128xi32>
    %8 = vector.broadcast %5 : i32 to vector<16x128xi32>
    %9 = arith.addi %8, %7 : vector<16x128xi32>
    %c374761393_i32 = arith.constant 374761393 : i32
    %10 = vector.broadcast %c374761393_i32 : i32 to vector<16x128xi32>
    %11 = arith.muli %2, %10 : vector<16x128xi32>
    %12 = arith.addi %9, %11 : vector<16x128xi32>
    %c16_i32 = arith.constant 16 : i32
    %13 = vector.broadcast %c16_i32 : i32 to vector<16x128xi32>
    %14 = arith.shrui %12, %13 : vector<16x128xi32>
    %15 = arith.xori %12, %14 : vector<16x128xi32>
    %c-2048144789_i32_0 = arith.constant -2048144789 : i32
    %16 = vector.broadcast %c-2048144789_i32_0 : i32 to vector<16x128xi32>
    %17 = arith.muli %15, %16 : vector<16x128xi32>
    %c13_i32 = arith.constant 13 : i32
    %18 = vector.broadcast %c13_i32 : i32 to vector<16x128xi32>
    %19 = arith.shrui %17, %18 : vector<16x128xi32>
    %20 = arith.xori %17, %19 : vector<16x128xi32>
    %c-1028477387_i32_1 = arith.constant -1028477387 : i32
    %21 = vector.broadcast %c-1028477387_i32_1 : i32 to vector<16x128xi32>
    %22 = arith.muli %20, %21 : vector<16x128xi32>
    %c16_i32_2 = arith.constant 16 : i32
    %23 = vector.broadcast %c16_i32_2 : i32 to vector<16x128xi32>
    %24 = arith.shrui %22, %23 : vector<16x128xi32>
    %25 = arith.xori %22, %24 : vector<16x128xi32>
    %c0_3 = arith.constant 0 : index
    %c0_4 = arith.constant 0 : index
    %26 = vector.load %arg2[%c0_3, %c0_4] : memref<16x128xbf16, #tpu.memory_space<vmem>>, vector<16x128xbf16>
    %c0_5 = arith.constant 0 : index
    %c0_6 = arith.constant 0 : index
    %27 = vector.load %arg3[%c0_5, %c0_6] : memref<128x128xbf16, #tpu.memory_space<vmem>>, vector<128x128xbf16>
    %cst = arith.constant dense<0.000000e+00> : vector<16x128xf32>
    %28 = tpu.matmul %26, %27, %cst {dimension_numbers = #tpu.dot_dimension_numbers<[1], [0], [0], [1], [0, 0, 1, 1], [], []>} : vector<16x128xbf16>, vector<128x128xbf16>, vector<16x128xf32> -> vector<16x128xf32>
    %c0_7 = arith.constant 0 : index
    %c0_8 = arith.constant 0 : index
    %29 = vector.load %arg6[%c0_7, %c0_8] : memref<3x128xf32, #tpu.memory_space<vmem>>, vector<1x128xf32>
    %30 = vector.broadcast %29 : vector<1x128xf32> to vector<16x128xf32>
    %31 = arith.addf %28, %30 : vector<16x128xf32>
    %c0_i32 = arith.constant 0 : i32
    %32 = vector.broadcast %c0_i32 : i32 to vector<16x128xi32>
    %33 = arith.shrui %25, %32 : vector<16x128xi32>
    %c1_i32 = arith.constant 1 : i32
    %34 = vector.broadcast %c1_i32 : i32 to vector<16x128xi32>
    %35 = arith.andi %33, %34 : vector<16x128xi32>
    %c0_i32_9 = arith.constant 0 : i32
    %36 = vector.broadcast %c0_i32_9 : i32 to vector<16x128xi32>
    %37 = arith.cmpi eq, %35, %36 : vector<16x128xi32>
    %cst_10 = arith.constant 0.000000e+00 : f32
    %38 = vector.broadcast %cst_10 : f32 to vector<16x128xf32>
    %39 = arith.cmpf ogt, %31, %38 : vector<16x128xf32>
    %40 = arith.andi %39, %37 : vector<16x128xi1>
    %cst_11 = arith.constant 2.000000e+00 : f32
    %41 = vector.broadcast %cst_11 : f32 to vector<16x128xf32>
    %42 = arith.mulf %31, %41 : vector<16x128xf32>
    %cst_12 = arith.constant 0.000000e+00 : f32
    %43 = vector.broadcast %cst_12 : f32 to vector<16x128xf32>
    %44 = arith.select %40, %42, %43 : vector<16x128xi1>, vector<16x128xf32>
    %45 = arith.truncf %44 : vector<16x128xf32> to vector<16x128xbf16>
    %c0_13 = arith.constant 0 : index
    %c0_14 = arith.constant 0 : index
    %46 = vector.load %arg4[%c0_13, %c0_14] : memref<128x128xbf16, #tpu.memory_space<vmem>>, vector<128x128xbf16>
    %cst_15 = arith.constant dense<0.000000e+00> : vector<16x128xf32>
    %47 = tpu.matmul %45, %46, %cst_15 {dimension_numbers = #tpu.dot_dimension_numbers<[1], [0], [0], [1], [0, 0, 1, 1], [], []>} : vector<16x128xbf16>, vector<128x128xbf16>, vector<16x128xf32> -> vector<16x128xf32>
    %c1 = arith.constant 1 : index
    %c0_16 = arith.constant 0 : index
    %48 = vector.load %arg6[%c1, %c0_16] : memref<3x128xf32, #tpu.memory_space<vmem>>, vector<1x128xf32>
    %49 = vector.broadcast %48 : vector<1x128xf32> to vector<16x128xf32>
    %50 = arith.addf %47, %49 : vector<16x128xf32>
    %c1_i32_17 = arith.constant 1 : i32
    %51 = vector.broadcast %c1_i32_17 : i32 to vector<16x128xi32>
    %52 = arith.shrui %25, %51 : vector<16x128xi32>
    %c1_i32_18 = arith.constant 1 : i32
    %53 = vector.broadcast %c1_i32_18 : i32 to vector<16x128xi32>
    %54 = arith.andi %52, %53 : vector<16x128xi32>
    %c0_i32_19 = arith.constant 0 : i32
    %55 = vector.broadcast %c0_i32_19 : i32 to vector<16x128xi32>
    %56 = arith.cmpi eq, %54, %55 : vector<16x128xi32>
    %cst_20 = arith.constant 0.000000e+00 : f32
    %57 = vector.broadcast %cst_20 : f32 to vector<16x128xf32>
    %58 = arith.cmpf ogt, %50, %57 : vector<16x128xf32>
    %59 = arith.andi %58, %56 : vector<16x128xi1>
    %cst_21 = arith.constant 2.000000e+00 : f32
    %60 = vector.broadcast %cst_21 : f32 to vector<16x128xf32>
    %61 = arith.mulf %50, %60 : vector<16x128xf32>
    %cst_22 = arith.constant 0.000000e+00 : f32
    %62 = vector.broadcast %cst_22 : f32 to vector<16x128xf32>
    %63 = arith.select %59, %61, %62 : vector<16x128xi1>, vector<16x128xf32>
    %64 = arith.truncf %63 : vector<16x128xf32> to vector<16x128xbf16>
    %c0_23 = arith.constant 0 : index
    %c0_24 = arith.constant 0 : index
    %65 = vector.load %arg5[%c0_23, %c0_24] : memref<128x128xbf16, #tpu.memory_space<vmem>>, vector<128x128xbf16>
    %cst_25 = arith.constant dense<0.000000e+00> : vector<16x128xf32>
    %66 = tpu.matmul %64, %65, %cst_25 {dimension_numbers = #tpu.dot_dimension_numbers<[1], [0], [0], [1], [0, 0, 1, 1], [], []>} : vector<16x128xbf16>, vector<128x128xbf16>, vector<16x128xf32> -> vector<16x128xf32>
    %c2 = arith.constant 2 : index
    %c0_26 = arith.constant 0 : index
    %67 = vector.load %arg6[%c2, %c0_26] : memref<3x128xf32, #tpu.memory_space<vmem>>, vector<1x128xf32>
    %68 = vector.broadcast %67 : vector<1x128xf32> to vector<16x128xf32>
    %69 = arith.addf %66, %68 : vector<16x128xf32>
    %c0_27 = arith.constant 0 : index
    %c0_28 = arith.constant 0 : index
    %70 = vector.load %arg7[%c0_27, %c0_28] : memref<16x128xf32, #tpu.memory_space<vmem>>, vector<16x128xf32>
    tpu.vector_store %arg7[%c0_27, %c0_28], %69 {strides = array<i32>} : memref<16x128xf32, #tpu.memory_space<vmem>>, vector<16x128xf32>,
    return
  }
  func.func @transform_0(%arg0: i32, %arg1: memref<1xi32, #tpu.memory_space<smem>>) -> (i32, i32) {
    %c0_i32 = arith.constant 0 : i32
    %c0_i32_0 = arith.constant 0 : i32
    return %arg0, %c0_i32 : i32, i32
  }
  func.func @transform_1(%arg0: i32, %arg1: memref<1xi32, #tpu.memory_space<smem>>) -> (i32, i32) {
    %c0_i32 = arith.constant 0 : i32
    %c0_i32_0 = arith.constant 0 : i32
    %c0_i32_1 = arith.constant 0 : i32
    return %c0_i32, %c0_i32_0 : i32, i32
  }
  func.func @transform_2(%arg0: i32, %arg1: memref<1xi32, #tpu.memory_space<smem>>) -> (i32, i32) {
    %c0_i32 = arith.constant 0 : i32
    %c0_i32_0 = arith.constant 0 : i32
    %c0_i32_1 = arith.constant 0 : i32
    return %c0_i32, %c0_i32_0 : i32, i32
  }
  func.func @transform_3(%arg0: i32, %arg1: memref<1xi32, #tpu.memory_space<smem>>) -> (i32, i32) {
    %c0_i32 = arith.constant 0 : i32
    %c0_i32_0 = arith.constant 0 : i32
    %c0_i32_1 = arith.constant 0 : i32
    return %c0_i32, %c0_i32_0 : i32, i32
  }
  func.func @transform_4(%arg0: i32, %arg1: memref<1xi32, #tpu.memory_space<smem>>) -> (i32, i32) {
    %c0_i32 = arith.constant 0 : i32
    %c0_i32_0 = arith.constant 0 : i32
    %c0_i32_1 = arith.constant 0 : i32
    return %c0_i32, %c0_i32_0 : i32, i32
  }
  func.func @transform_5(%arg0: i32, %arg1: memref<1xi32, #tpu.memory_space<smem>>) -> (i32, i32) {
    %c0_i32 = arith.constant 0 : i32
    %c0_i32_0 = arith.constant 0 : i32
    return %arg0, %c0_i32 : i32, i32
  }
}

</mosaic_0001>

<llo_original>
// kernel: tpu_custom_call.1
$region0: #{tpu_custom_call.1}
  #allocation0 [shape = 'u32[]', space=smem, size = 0x4, offset = 0x4, fixed_abs, tag = 'smem constant byte address 0x4 - core index']
  #allocation1 [shape = 'u32[144,128]{1,0:T(1,128)}', space=vmem, size = 0x12000, scoped, tag = 'internal scratch']
  #allocation2 [shape = 's32[1]{0}', space=sflag, size = 0x4, scoped, tag = 'scoped memory for tpu_custom_call.1']
  #allocation3 [shape = 's32[1]{0:T(128)S(6)}', space=smem, size = 0x200, scoped, tag = 'prefetched SMEM operand 0']
  %s0 = inlined_call_operand.<no memory space> [shape: s32[1], index: 0, kind: input, shape index: {}]
  %s1 = inlined_call_operand.hbm [shape: bf16[16,128], index: 1, kind: input, shape index: {}]
  %s2 = inlined_call_operand.hbm [shape: bf16[128,128], index: 2, kind: input, shape index: {}]
  %s3 = inlined_call_operand.hbm [shape: bf16[128,128], index: 3, kind: input, shape index: {}]
  %s4 = inlined_call_operand.hbm [shape: bf16[128,128], index: 4, kind: input, shape index: {}]
  %s5 = inlined_call_operand.vmem [shape: f32[3,128], index: 5, kind: input, shape index: {}]
  %s6 = inlined_call_operand.hbm [shape: f32[16,128], index: 6, kind: output, shape index: {}]
  %s7 = sld [smem:[#allocation0]]
  $region46: #{tpu_custom_call.1} parent=0
    _
  %s9 = ssub.s32 1, %s7
  %s10 = scalar_select 0, %s9, %s7
  %11 = sst [smem:[#allocation3]] %s0
  $region1: #{tpu_custom_call.1} parent=0
    #allocation4 [shape = 'u8[4096]{0}', space=vmem, size = 0x1000, scoped, tag = 'input window, operand 1, single buffered']
    #allocation5 [shape = 's32[1]{0}', space=sflag, size = 0x4, scoped, tag = 'scoped memory for tpu_custom_call.1']
    #allocation6 [shape = 's32[1]{0}', space=sflag, size = 0x4, scoped, tag = 'scoped memory for tpu_custom_call.1']
    #allocation7 [shape = 'u8[32768]{0}', space=vmem, size = 0x8000, scoped, tag = 'input window, operand 2, single buffered']
    #allocation8 [shape = 's32[1]{0}', space=sflag, size = 0x4, scoped, tag = 'scoped memory for tpu_custom_call.1']
    #allocation9 [shape = 'u8[32768]{0}', space=vmem, size = 0x8000, scoped, tag = 'input window, operand 3, single buffered']
    #allocation10 [shape = 'u8[32768]{0}', space=vmem, size = 0x8000, scoped, tag = 'input window, operand 4, single buffered']
    #allocation11 [shape = 's32[1]{0}', space=sflag, size = 0x4, scoped, tag = 'scoped memory for tpu_custom_call.1']
    #allocation12 [shape = 'u8[8192]{0}', space=vmem, size = 0x2000, scoped, tag = 'output window, operand 0, single buffered']
    %12 = vsyncpa [#allocation5], 0
    %13 = vsyncpa [#allocation8], 0
    %14 = vsyncpa [#allocation11], 0
    %15 = vsyncpa [#allocation6], 0
    // Predicated region
    $region2: #{tpu_custom_call.1} parent=1 // pred_check
      _
    $region3: #{tpu_custom_call.1} parent=1 // pred_check_branch
      %17 = sbr.rel (0) target = $region5
    $region4: #{tpu_custom_call.1} parent=1 // pred_region
      %s19 = ssub.s32 128, 128
      %20 = vsyncadd [#allocation5], %s19
      %s21 = sshll.u32 [#allocation4], 4
      %s22 = int_to_ptr.vmem [resolvable:$true] %s21
      %27 = dma.hbm_to_vmem [thread:$0]  %s1, 128, %s22, [#allocation5], 64, 64, 4
    $region5: #{tpu_custom_call.1} parent=1 // pred_fallthru
      _
    // Predicated region
    $region6: #{tpu_custom_call.1} parent=1 // pred_check
      _
    $region7: #{tpu_custom_call.1} parent=1 // pred_check_branch
      %29 = sbr.rel (0) target = $region9
    $region8: #{tpu_custom_call.1} parent=1 // pred_region
      %s31 = ssub.s32 1024, 1024
      %32 = vsyncadd [#allocation8], %s31
      %s33 = sshll.u32 [#allocation7], 4
      %s34 = int_to_ptr.vmem [resolvable:$true] %s33
      %39 = dma.hbm_to_vmem [thread:$0]  %s2, 1024, %s34, [#allocation8], 64, 64, 4
    $region9: #{tpu_custom_call.1} parent=1 // pred_fallthru
      _
    // Predicated region
    $region10: #{tpu_custom_call.1} parent=1 // pred_check
      _
    $region11: #{tpu_custom_call.1} parent=1 // pred_check_branch
      %41 = sbr.rel (0) target = $region13
    $region12: #{tpu_custom_call.1} parent=1 // pred_region
      %s43 = ssub.s32 1024, 1024
      %44 = vsyncadd [#allocation8], %s43
      %s45 = sshll.u32 [#allocation9], 4
      %s46 = int_to_ptr.vmem [resolvable:$true] %s45
      %51 = dma.hbm_to_vmem [thread:$0]  %s3, 1024, %s46, [#allocation8], 64, 64, 4
    $region13: #{tpu_custom_call.1} parent=1 // pred_fallthru
      _
    // Predicated region
    $region14: #{tpu_custom_call.1} parent=1 // pred_check
      _
    $region15: #{tpu_custom_call.1} parent=1 // pred_check_branch
      %53 = sbr.rel (0) target = $region17
    $region16: #{tpu_custom_call.1} parent=1 // pred_region
      %s55 = ssub.s32 1024, 1024
      %56 = vsyncadd [#allocation11], %s55
      %s57 = sshll.u32 [#allocation10], 4
      %s58 = int_to_ptr.vmem [resolvable:$true] %s57
      %63 = dma.hbm_to_vmem [thread:$0]  %s4, 1024, %s58, [#allocation11], 64, 64, 4
    $region17: #{tpu_custom_call.1} parent=1 // pred_fallthru
      _
    // Predicated region
    $region18: #{tpu_custom_call.1} parent=1 // pred_check
      _
    $region19: #{tpu_custom_call.1} parent=1 // pred_check_branch
      %65 = sbr.rel (0) target = $region21
    $region20: #{tpu_custom_call.1} parent=1 // pred_region
      _
    $region21: #{tpu_custom_call.1} parent=1 // pred_fallthru
      _
    // Predicated region
    $region22: #{tpu_custom_call.1} parent=1 // pred_check
      _
    $region23: #{tpu_custom_call.1} parent=1 // pred_check_branch
      %67 = sbr.rel (0) target = $region25
    $region24: #{tpu_custom_call.1} parent=1 // pred_region
      %68 = dma.done [#allocation5], 128
    $region25: #{tpu_custom_call.1} parent=1 // pred_fallthru
      _
    // Predicated region
    $region26: #{tpu_custom_call.1} parent=1 // pred_check
      _
    $region27: #{tpu_custom_call.1} parent=1 // pred_check_branch
      %70 = sbr.rel (0) target = $region29
    $region28: #{tpu_custom_call.1} parent=1 // pred_region
      %71 = dma.done [#allocation8], 1024
    $region29: #{tpu_custom_call.1} parent=1 // pred_fallthru
      _
    // Predicated region
    $region30: #{tpu_custom_call.1} parent=1 // pred_check
      _
    $region31: #{tpu_custom_call.1} parent=1 // pred_check_branch
      %73 = sbr.rel (0) target = $region33
    $region32: #{tpu_custom_call.1} parent=1 // pred_region
      %74 = dma.done [#allocation8], 1024
    $region33: #{tpu_custom_call.1} parent=1 // pred_fallthru
      _
    // Predicated region
    $region34: #{tpu_custom_call.1} parent=1 // pred_check
      _
    $region35: #{tpu_custom_call.1} parent=1 // pred_check_branch
      %76 = sbr.rel (0) target = $region37
    $region36: #{tpu_custom_call.1} parent=1 // pred_region
      %77 = dma.done [#allocation11], 1024
    $region37: #{tpu_custom_call.1} parent=1 // pred_fallthru
      _
    %s79 = sld [smem:[#allocation3]]
    %v80 = vlaneseq
    %v81 = vshrl.u32 %v80, 7
    %v82 = vadd.s32 %v81, 8
    %v83 = vlaneseq
    %v84 = vand.u32 %v83, 127
    %s85 = smul.u32 %s79, 2246822507
    %s86 = smul.u32 0, 3266489909
    %s87 = sadd.s32 %s85, %s86
    %v88 = vmul.u32 %v81, 668265263
    %v89 = vmul.u32 %v82, 668265263
    %v90 = vstv %s87
    %v91 = vadd.s32 %v90, %v88
    %v92 = vadd.s32 %v90, %v89
    %v93 = vmul.u32 %v84, 374761393
    %v94 = vadd.s32 %v91, %v93
    %v95 = vadd.s32 %v92, %v93
    %v96 = vshrl.u32 %v94, 16
    %v97 = vshrl.u32 %v95, 16
    %v98 = vxor.u32 %v94, %v96
    %v99 = vxor.u32 %v95, %v97
    %v100 = vmul.u32 %v98, 2246822507
    %v101 = vmul.u32 %v99, 2246822507
    %v102 = vshrl.u32 %v100, 13
    %v103 = vshrl.u32 %v101, 13
    %v104 = vxor.u32 %v100, %v102
    %v105 = vxor.u32 %v101, %v103
    %v106 = vmul.u32 %v104, 3266489909
    %v107 = vmul.u32 %v105, 3266489909
    %v108 = vshrl.u32 %v106, 16
    %v109 = vshrl.u32 %v107, 16
    %v110 = vxor.u32 %v106, %v108
    %v111 = vxor.u32 %v107, %v109
    %v112 = vld [vmem:[#allocation4] sm:$0xf]
    %v113 = vld [vmem:[#allocation4 + $0x4] sm:$0xf]
    %v114 = vld [vmem:[#allocation7] sm:$0xf]
    %v115 = vld [vmem:[#allocation7 + $0x4] sm:$0xf]
    %v116 = vld [vmem:[#allocation7 + $0x8] sm:$0xf]
    %v117 = vld [vmem:[#allocation7 + $0xc] sm:$0xf]
    %v118 = vld [vmem:[#allocation7 + $0x10] sm:$0xf]
    %v119 = vld [vmem:[#allocation7 + $0x14] sm:$0xf]
    %v120 = vld [vmem:[#allocation7 + $0x18] sm:$0xf]
    %v121 = vld [vmem:[#allocation7 + $0x1c] sm:$0xf]
    %v122 = vld [vmem:[#allocation7 + $0x20] sm:$0xf]
    %v123 = vld [vmem:[#allocation7 + $0x24] sm:$0xf]
    %v124 = vld [vmem:[#allocation7 + $0x28] sm:$0xf]
    %v125 = vld [vmem:[#allocation7 + $0x2c] sm:$0xf]
    %v126 = vld [vmem:[#allocation7 + $0x30] sm:$0xf]
    %v127 = vld [vmem:[#allocation7 + $0x34] sm:$0xf]
    %v128 = vld [vmem:[#allocation7 + $0x38] sm:$0xf]
    %v129 = vld [vmem:[#allocation7 + $0x3c] sm:$0xf]
    %v130 = vld [vmem:[%s5] sm:$0x1]
    %v131 = vlaneseq
    %v132 = vshrl.u32 %v131, 7
    %v133 = vsub.s32 0, %v132
    %v134 = vrot.slane %v130, %v133
    %v137 = vunpack.c.l.b16 %v112
    %v138 = vunpack.c.l.b16 %v113
    %v139 = vpack.c.b16 %v138, %v137
    %v157 = vunpack.c.l.b16 %v114
    %v158 = vunpack.c.l.b16 %v115
    %v159 = vunpack.c.l.b16 %v116
    %v160 = vunpack.c.l.b16 %v117
    %v161 = vunpack.c.l.b16 %v118
    %v162 = vunpack.c.l.b16 %v119
    %v163 = vunpack.c.l.b16 %v120
    %v164 = vunpack.c.l.b16 %v121
    %v165 = vunpack.c.l.b16 %v122
    %v166 = vunpack.c.l.b16 %v123
    %v167 = vunpack.c.l.b16 %v124
    %v168 = vunpack.c.l.b16 %v125
    %v169 = vunpack.c.l.b16 %v126
    %v170 = vunpack.c.l.b16 %v127
    %v171 = vunpack.c.l.b16 %v128
    %v172 = vunpack.c.l.b16 %v129
    %v173 = vpack.c.b16 %v158, %v157
    %v174 = vpack.c.b16 %v160, %v159
    %v175 = vpack.c.b16 %v162, %v161
    %v176 = vpack.c.b16 %v164, %v163
    %v177 = vpack.c.b16 %v166, %v165
    %v178 = vpack.c.b16 %v168, %v167
    %v179 = vpack.c.b16 %v170, %v169
    %v180 = vpack.c.b16 %v172, %v171
    %189 = vmatprep.subr.bf16.mxu0 0
    %190 = vmatpush1.bf16.msra.mxu0 %v173
    %191 = vmatprep.subr.bf16.mxu0 0
    %192 = vmatpush1.bf16.msra.mxu0 %v174
    %193 = vmatprep.subr.bf16.mxu0 0
    %194 = vmatpush1.bf16.msra.mxu0 %v175
    %195 = vmatprep.subr.bf16.mxu0 0
    %196 = vmatpush1.bf16.msra.mxu0 %v176
    %197 = vmatprep.subr.bf16.mxu0 0
    %198 = vmatpush1.bf16.msra.mxu0 %v177
    %199 = vmatprep.subr.bf16.mxu0 0
    %200 = vmatpush1.bf16.msra.mxu0 %v178
    %201 = vmatprep.subr.bf16.mxu0 0
    %202 = vmatpush1.bf16.msra.mxu0 %v179
    %203 = vmatprep.subr.bf16.mxu0 0
    %204 = vmatpush1.bf16.msra.mxu0 %v180
    %205 = vmatprep.subr.bf16.mxu0 0
    %206 = vmatpush1.bf16.msra.mxu0 0
    %207 = vmatprep.subr.bf16.mxu0 0
    %208 = vmatpush1.bf16.msra.mxu0 0
    %209 = vmatprep.subr.bf16.mxu0 0
    %210 = vmatpush1.bf16.msra.mxu0 0
    %211 = vmatprep.subr.bf16.mxu0 0
    %212 = vmatpush1.bf16.msra.mxu0 0
    %213 = vmatprep.subr.bf16.mxu0 0
    %214 = vmatpush1.bf16.msra.mxu0 0
    %215 = vmatprep.subr.bf16.mxu0 0
    %216 = vmatpush1.bf16.msra.mxu0 0
    %217 = vmatprep.subr.bf16.mxu0 0
    %218 = vmatpush1.bf16.msra.mxu0 0
    %219 = vmatprep.subr.bf16.mxu0 0
    %220 = vmatpush1.bf16.msra.mxu0 0
    %221 = vmatprep.mubr.bf16.mxu0 0
    %222 = vmatmul.mubr.bf16.gmra.mrb[0].mxu0 %v139
    %v223 = vpop.f32.mrb[0].mxu0
    %v224 = vadd.f32 %v134, %v223
    %v225 = vpop.f32.mrb[0].mxu0
    %v226 = vpop.f32.mrb[0].mxu0
    %v227 = vadd.f32 %v134, %v226
    %v228 = vpop.f32.mrb[0].mxu0
    %229 = vdwg.mxu0
    %v230 = vand.u32 %v110, 1
    %v231 = vand.u32 %v111, 1
    %vm232 = vcmp.eq.s32.totalorder %v230, 0
    %vm233 = vcmp.eq.s32.totalorder %v231, 0
    %vm234 = vcmp.gt.f32.partialorder %v224, 0.0
    %vm235 = vcmp.gt.f32.partialorder %v227, 0.0
    %vm236 = vmand %vm234, %vm232
    %vm237 = vmand %vm235, %vm233
    %v238 = vmul.f32 %v224, 2.0
    %v239 = vmul.f32 %v227, 2.0
    %v240 = vsel %vm236, %v238, 0.0
    %v241 = vsel %vm237, %v239, 0.0
    %v242 = vpack.c.bf16 %v241, %v240
    %v243 = vld [vmem:[#allocation9] sm:$0xf]
    %v244 = vld [vmem:[#allocation9 + $0x4] sm:$0xf]
    %v245 = vld [vmem:[#allocation9 + $0x8] sm:$0xf]
    %v246 = vld [vmem:[#allocation9 + $0xc] sm:$0xf]
    %v247 = vld [vmem:[#allocation9 + $0x10] sm:$0xf]
    %v248 = vld [vmem:[#allocation9 + $0x14] sm:$0xf]
    %v249 = vld [vmem:[#allocation9 + $0x18] sm:$0xf]
    %v250 = vld [vmem:[#allocation9 + $0x1c] sm:$0xf]
    %v251 = vld [vmem:[#allocation9 + $0x20] sm:$0xf]
    %v252 = vld [vmem:[#allocation9 + $0x24] sm:$0xf]
    %v253 = vld [vmem:[#allocation9 + $0x28] sm:$0xf]
    %v254 = vld [vmem:[#allocation9 + $0x2c] sm:$0xf]
    %v255 = vld [vmem:[#allocation9 + $0x30] sm:$0xf]
    %v256 = vld [vmem:[#allocation9 + $0x34] sm:$0xf]
    %v257 = vld [vmem:[#allocation9 + $0x38] sm:$0xf]
    %v258 = vld [vmem:[#allocation9 + $0x3c] sm:$0xf]
    %v259 = vld [vmem:[%s5 + $0x1] sm:$0x1]
    %v260 = vlaneseq
    %v261 = vshrl.u32 %v260, 7
    %v262 = vsub.s32 0, %v261
    %v263 = vrot.slane %v259, %v262
    %v280 = vunpack.c.l.b16 %v243
    %v281 = vunpack.c.l.b16 %v244
    %v282 = vunpack.c.l.b16 %v245
    %v283 = vunpack.c.l.b16 %v246
    %v284 = vunpack.c.l.b16 %v247
    %v285 = vunpack.c.l.b16 %v248
    %v286 = vunpack.c.l.b16 %v249
    %v287 = vunpack.c.l.b16 %v250
    %v288 = vunpack.c.l.b16 %v251
    %v289 = vunpack.c.l.b16 %v252
    %v290 = vunpack.c.l.b16 %v253
    %v291 = vunpack.c.l.b16 %v254
    %v292 = vunpack.c.l.b16 %v255
    %v293 = vunpack.c.l.b16 %v256
    %v294 = vunpack.c.l.b16 %v257
    %v295 = vunpack.c.l.b16 %v258
    %v296 = vpack.c.b16 %v281, %v280
    %v297 = vpack.c.b16 %v283, %v282
    %v298 = vpack.c.b16 %v285, %v284
    %v299 = vpack.c.b16 %v287, %v286
    %v300 = vpack.c.b16 %v289, %v288
    %v301 = vpack.c.b16 %v291, %v290
    %v302 = vpack.c.b16 %v293, %v292
    %v303 = vpack.c.b16 %v295, %v294
    %312 = vmatprep.subr.bf16.mxu0 0
    %313 = vmatpush1.bf16.msra.mxu0 %v296
    %314 = vmatprep.subr.bf16.mxu0 0
    %315 = vmatpush1.bf16.msra.mxu0 %v297
    %316 = vmatprep.subr.bf16.mxu0 0
    %317 = vmatpush1.bf16.msra.mxu0 %v298
    %318 = vmatprep.subr.bf16.mxu0 0
    %319 = vmatpush1.bf16.msra.mxu0 %v299
    %320 = vmatprep.subr.bf16.mxu0 0
    %321 = vmatpush1.bf16.msra.mxu0 %v300
    %322 = vmatprep.subr.bf16.mxu0 0
    %323 = vmatpush1.bf16.msra.mxu0 %v301
    %324 = vmatprep.subr.bf16.mxu0 0
    %325 = vmatpush1.bf16.msra.mxu0 %v302
    %326 = vmatprep.subr.bf16.mxu0 0
    %327 = vmatpush1.bf16.msra.mxu0 %v303
    %328 = vmatprep.subr.bf16.mxu0 0
    %329 = vmatpush1.bf16.msra.mxu0 0
    %330 = vmatprep.subr.bf16.mxu0 0
    %331 = vmatpush1.bf16.msra.mxu0 0
    %332 = vmatprep.subr.bf16.mxu0 0
    %333 = vmatpush1.bf16.msra.mxu0 0
    %334 = vmatprep.subr.bf16.mxu0 0
    %335 = vmatpush1.bf16.msra.mxu0 0
    %336 = vmatprep.subr.bf16.mxu0 0
    %337 = vmatpush1.bf16.msra.mxu0 0
    %338 = vmatprep.subr.bf16.mxu0 0
    %339 = vmatpush1.bf16.msra.mxu0 0
    %340 = vmatprep.subr.bf16.mxu0 0
    %341 = vmatpush1.bf16.msra.mxu0 0
    %342 = vmatprep.subr.bf16.mxu0 0
    %343 = vmatpush1.bf16.msra.mxu0 0
    %344 = vmatprep.mubr.bf16.mxu0 0
    %345 = vmatmul.mubr.bf16.gmra.mrb[0].mxu0 %v242
    %v346 = vpop.f32.mrb[0].mxu0
    %v347 = vadd.f32 %v263, %v346
    %v348 = vpop.f32.mrb[0].mxu0
    %v349 = vpop.f32.mrb[0].mxu0
    %v350 = vadd.f32 %v263, %v349
    %v351 = vpop.f32.mrb[0].mxu0
    %352 = vdwg.mxu0
    %v353 = vshrl.u32 %v110, 1
    %v354 = vshrl.u32 %v111, 1
    %v355 = vand.u32 %v353, 1
    %v356 = vand.u32 %v354, 1
    %vm357 = vcmp.eq.s32.totalorder %v355, 0
    %vm358 = vcmp.eq.s32.totalorder %v356, 0
    %vm359 = vcmp.gt.f32.partialorder %v347, 0.0
    %vm360 = vcmp.gt.f32.partialorder %v350, 0.0
    %vm361 = vmand %vm359, %vm357
    %vm362 = vmand %vm360, %vm358
    %v363 = vmul.f32 %v347, 2.0
    %v364 = vmul.f32 %v350, 2.0
    %v365 = vsel %vm361, %v363, 0.0
    %v366 = vsel %vm362, %v364, 0.0
    %v367 = vpack.c.bf16 %v366, %v365
    %v368 = vld [vmem:[#allocation10] sm:$0xf]
    %v369 = vld [vmem:[#allocation10 + $0x4] sm:$0xf]
    %v370 = vld [vmem:[#allocation10 + $0x8] sm:$0xf]
    %v371 = vld [vmem:[#allocation10 + $0xc] sm:$0xf]
    %v372 = vld [vmem:[#allocation10 + $0x10] sm:$0xf]
    %v373 = vld [vmem:[#allocation10 + $0x14] sm:$0xf]
    %v374 = vld [vmem:[#allocation10 + $0x18] sm:$0xf]
    %v375 = vld [vmem:[#allocation10 + $0x1c] sm:$0xf]
    %v376 = vld [vmem:[#allocation10 + $0x20] sm:$0xf]
    %v377 = vld [vmem:[#allocation10 + $0x24] sm:$0xf]
    %v378 = vld [vmem:[#allocation10 + $0x28] sm:$0xf]
    %v379 = vld [vmem:[#allocation10 + $0x2c] sm:$0xf]
    %v380 = vld [vmem:[#allocation10 + $0x30] sm:$0xf]
    %v381 = vld [vmem:[#allocation10 + $0x34] sm:$0xf]
    %v382 = vld [vmem:[#allocation10 + $0x38] sm:$0xf]
    %v383 = vld [vmem:[#allocation10 + $0x3c] sm:$0xf]
    %v384 = vld [vmem:[%s5 + $0x2] sm:$0x1]
    %v385 = vlaneseq
    %v386 = vshrl.u32 %v385, 7
    %v387 = vsub.s32 0, %v386
    %v388 = vrot.slane %v384, %v387
    %v405 = vunpack.c.l.b16 %v368
    %v406 = vunpack.c.l.b16 %v369
    %v407 = vunpack.c.l.b16 %v370
    %v408 = vunpack.c.l.b16 %v371
    %v409 = vunpack.c.l.b16 %v372
    %v410 = vunpack.c.l.b16 %v373
    %v411 = vunpack.c.l.b16 %v374
    %v412 = vunpack.c.l.b16 %v375
    %v413 = vunpack.c.l.b16 %v376
    %v414 = vunpack.c.l.b16 %v377
    %v415 = vunpack.c.l.b16 %v378
    %v416 = vunpack.c.l.b16 %v379
    %v417 = vunpack.c.l.b16 %v380
    %v418 = vunpack.c.l.b16 %v381
    %v419 = vunpack.c.l.b16 %v382
    %v420 = vunpack.c.l.b16 %v383
    %v421 = vpack.c.b16 %v406, %v405
    %v422 = vpack.c.b16 %v408, %v407
    %v423 = vpack.c.b16 %v410, %v409
    %v424 = vpack.c.b16 %v412, %v411
    %v425 = vpack.c.b16 %v414, %v413
    %v426 = vpack.c.b16 %v416, %v415
    %v427 = vpack.c.b16 %v418, %v417
    %v428 = vpack.c.b16 %v420, %v419
    %437 = vmatprep.subr.bf16.mxu0 0
    %438 = vmatpush1.bf16.msra.mxu0 %v421
    %439 = vmatprep.subr.bf16.mxu0 0
    %440 = vmatpush1.bf16.msra.mxu0 %v422
    %441 = vmatprep.subr.bf16.mxu0 0
    %442 = vmatpush1.bf16.msra.mxu0 %v423
    %443 = vmatprep.subr.bf16.mxu0 0
    %444 = vmatpush1.bf16.msra.mxu0 %v424
    %445 = vmatprep.subr.bf16.mxu0 0
    %446 = vmatpush1.bf16.msra.mxu0 %v425
    %447 = vmatprep.subr.bf16.mxu0 0
    %448 = vmatpush1.bf16.msra.mxu0 %v426
    %449 = vmatprep.subr.bf16.mxu0 0
    %450 = vmatpush1.bf16.msra.mxu0 %v427
    %451 = vmatprep.subr.bf16.mxu0 0
    %452 = vmatpush1.bf16.msra.mxu0 %v428
    %453 = vmatprep.subr.bf16.mxu0 0
    %454 = vmatpush1.bf16.msra.mxu0 0
    %455 = vmatprep.subr.bf16.mxu0 0
    %456 = vmatpush1.bf16.msra.mxu0 0
    %457 = vmatprep.subr.bf16.mxu0 0
    %458 = vmatpush1.bf16.msra.mxu0 0
    %459 = vmatprep.subr.bf16.mxu0 0
    %460 = vmatpush1.bf16.msra.mxu0 0
    %461 = vmatprep.subr.bf16.mxu0 0
    %462 = vmatpush1.bf16.msra.mxu0 0
    %463 = vmatprep.subr.bf16.mxu0 0
    %464 = vmatpush1.bf16.msra.mxu0 0
    %465 = vmatprep.subr.bf16.mxu0 0
    %466 = vmatpush1.bf16.msra.mxu0 0
    %467 = vmatprep.subr.bf16.mxu0 0
    %468 = vmatpush1.bf16.msra.mxu0 0
    %469 = vmatprep.mubr.bf16.mxu0 0
    %470 = vmatmul.mubr.bf16.gmra.mrb[0].mxu0 %v367
    %v471 = vpop.f32.mrb[0].mxu0
    %v472 = vadd.f32 %v388, %v471
    %v473 = vpop.f32.mrb[0].mxu0
    %v474 = vpop.f32.mrb[0].mxu0
    %v475 = vadd.f32 %v388, %v474
    %v476 = vpop.f32.mrb[0].mxu0
    %477 = vdwg.mxu0
    %478 = vst [vmem:[#allocation12] sm:$0xff] %v472
    %479 = vst [vmem:[#allocation12 + $0x8] sm:$0xff] %v475
    // Predicated region
    $region38: #{tpu_custom_call.1} parent=1 // pred_check
      _
    $region39: #{tpu_custom_call.1} parent=1 // pred_check_branch
      %481 = sbr.rel (0) target = $region41
    $region40: #{tpu_custom_call.1} parent=1 // pred_region
      %s483 = ssub.s32 256, 256
      %484 = vsyncadd [#allocation6], %s483
      %s485 = sshll.u32 [#allocation12], 4
      %s486 = int_to_ptr.vmem [resolvable:$true] %s485
      %491 = dma.vmem_to_hbm [thread:$0]  %s486, 256, %s6, [#allocation6], 128, 128, 8
    $region41: #{tpu_custom_call.1} parent=1 // pred_fallthru
      _
    // Predicated region
    $region42: #{tpu_custom_call.1} parent=1 // pred_check
      _
    $region43: #{tpu_custom_call.1} parent=1 // pred_check_branch
      %493 = sbr.rel (0) target = $region45
    $region44: #{tpu_custom_call.1} parent=1 // pred_region
      %494 = dma.done [#allocation6], 256
    $region45: #{tpu_custom_call.1} parent=1 // pred_fallthru
      _
    %495 = vsyncpa [#allocation5], 1
    %496 = vsyncpa [#allocation8], 1
    %497 = vsyncpa [#allocation11], 1
    %498 = vsyncpa [#allocation6], 1

// kernel: tpu_custom_call.1
$region0: #{tpu_custom_call.1}
  #allocation0 [shape = 'u32[]', space=smem, size = 0x4, offset = 0x4, fixed_abs, tag = 'smem constant byte address 0x4 - core index']
  #allocation1 [shape = 'u32[144,128]{1,0:T(1,128)}', space=vmem, size = 0x12000, scoped, tag = 'internal scratch']
  #allocation2 [shape = 's32[1]{0}', space=sflag, size = 0x4, scoped, tag = 'scoped memory for tpu_custom_call.1']
  #allocation3 [shape = 's32[1]{0:T(128)S(6)}', space=smem, size = 0x200, scoped, tag = 'prefetched SMEM operand 0']
  %s0 = inlined_call_operand.<no memory space> [shape: s32[1], index: 0, kind: input, shape index: {}]
  %s1 = inlined_call_operand.hbm [shape: bf16[16,128], index: 1, kind: input, shape index: {}]
  %s2 = inlined_call_operand.hbm [shape: bf16[128,128], index: 2, kind: input, shape index: {}]
  %s3 = inlined_call_operand.hbm [shape: bf16[128,128], index: 3, kind: input, shape index: {}]
  %s4 = inlined_call_operand.hbm [shape: bf16[128,128], index: 4, kind: input, shape index: {}]
  %s5 = inlined_call_operand.vmem [shape: f32[3,128], index: 5, kind: input, shape index: {}]
  %s6 = inlined_call_operand.hbm [shape: f32[16,128], index: 6, kind: output, shape index: {}]
  %s7 = sld [smem:[#allocation0]]
  $region46: #{tpu_custom_call.1} parent=0
    _
  %s9 = ssub.s32 1, %s7
  %s10 = scalar_select 0, %s9, %s7
  %11 = sst [smem:[#allocation3]] %s0
  $region1: #{tpu_custom_call.1} parent=0
    #allocation4 [shape = 'u8[4096]{0}', space=vmem, size = 0x1000, scoped, tag = 'input window, operand 1, single buffered']
    #allocation5 [shape = 's32[1]{0}', space=sflag, size = 0x4, scoped, tag = 'scoped memory for tpu_custom_call.1']
    #allocation6 [shape = 's32[1]{0}', space=sflag, size = 0x4, scoped, tag = 'scoped memory for tpu_custom_call.1']
    #allocation7 [shape = 'u8[32768]{0}', space=vmem, size = 0x8000, scoped, tag = 'input window, operand 2, single buffered']
    #allocation8 [shape = 's32[1]{0}', space=sflag, size = 0x4, scoped, tag = 'scoped memory for tpu_custom_call.1']
    #allocation9 [shape = 'u8[32768]{0}', space=vmem, size = 0x8000, scoped, tag = 'input window, operand 3, single buffered']
    #allocation10 [shape = 'u8[32768]{0}', space=vmem, size = 0x8000, scoped, tag = 'input window, operand 4, single buffered']
    #allocation11 [shape = 's32[1]{0}', space=sflag, size = 0x4, scoped, tag = 'scoped memory for tpu_custom_call.1']
    #allocation12 [shape = 'u8[8192]{0}', space=vmem, size = 0x2000, scoped, tag = 'output window, operand 0, single buffered']
    %12 = vsyncpa [#allocation5], 0
    %13 = vsyncpa [#allocation8], 0
    %14 = vsyncpa [#allocation11], 0
    %15 = vsyncpa [#allocation6], 0
    // Predicated region
    $region2: #{tpu_custom_call.1} parent=1 // pred_check
      _
    $region3: #{tpu_custom_call.1} parent=1 // pred_check_branch
      %17 = sbr.rel (0) target = $region5
    $region4: #{tpu_custom_call.1} parent=1 // pred_region
      %s19 = ssub.s32 128, 128
      %20 = vsyncadd [#allocation5], %s19
      %s21 = sshll.u32 [#allocation4], 4
      %s22 = int_to_ptr.vmem [resolvable:$true] %s21
      %27 = dma.hbm_to_vmem [thread:$0]  %s1, 128, %s22, [#allocation5], 64, 64, 4
    $region5: #{tpu_custom_call.1} parent=1 // pred_fallthru
      _
    // Predicated region
    $region6: #{tpu_custom_call.1} parent=1 // pred_check
      _
    $region7: #{tpu_custom_call.1} parent=1 // pred_check_branch
      %29 = sbr.rel (0) target = $region9
    $region8: #{tpu_custom_call.1} parent=1 // pred_region
      %s31 = ssub.s32 1024, 1024
      %32 = vsyncadd [#allocation8], %s31
      %s33 = sshll.u32 [#allocation7], 4
      %s34 = int_to_ptr.vmem [resolvable:$true] %s33
      %39 = dma.hbm_to_vmem [thread:$0]  %s2, 1024, %s34, [#allocation8], 64, 64, 4
    $region9: #{tpu_custom_call.1} parent=1 // pred_fallthru
      _
    // Predicated region
    $region10: #{tpu_custom_call.1} parent=1 // pred_check
      _
    $region11: #{tpu_custom_call.1} parent=1 // pred_check_branch
      %41 = sbr.rel (0) target = $region13
    $region12: #{tpu_custom_call.1} parent=1 // pred_region
      %s43 = ssub.s32 1024, 1024
      %44 = vsyncadd [#allocation8], %s43
      %s45 = sshll.u32 [#allocation9], 4
      %s46 = int_to_ptr.vmem [resolvable:$true] %s45
      %51 = dma.hbm_to_vmem [thread:$0]  %s3, 1024, %s46, [#allocation8], 64, 64, 4
    $region13: #{tpu_custom_call.1} parent=1 // pred_fallthru
      _
    // Predicated region
    $region14: #{tpu_custom_call.1} parent=1 // pred_check
      _
    $region15: #{tpu_custom_call.1} parent=1 // pred_check_branch
      %53 = sbr.rel (0) target = $region17
    $region16: #{tpu_custom_call.1} parent=1 // pred_region
      %s55 = ssub.s32 1024, 1024
      %56 = vsyncadd [#allocation11], %s55
      %s57 = sshll.u32 [#allocation10], 4
      %s58 = int_to_ptr.vmem [resolvable:$true] %s57
      %63 = dma.hbm_to_vmem [thread:$0]  %s4, 1024, %s58, [#allocation11], 64, 64, 4
    $region17: #{tpu_custom_call.1} parent=1 // pred_fallthru
      _
    // Predicated region
    $region18: #{tpu_custom_call.1} parent=1 // pred_check
      _
    $region19: #{tpu_custom_call.1} parent=1 // pred_check_branch
      %65 = sbr.rel (0) target = $region21
    $region20: #{tpu_custom_call.1} parent=1 // pred_region
      _
    $region21: #{tpu_custom_call.1} parent=1 // pred_fallthru
      _
    // Predicated region
    $region22: #{tpu_custom_call.1} parent=1 // pred_check
      _
    $region23: #{tpu_custom_call.1} parent=1 // pred_check_branch
      %67 = sbr.rel (0) target = $region25
    $region24: #{tpu_custom_call.1} parent=1 // pred_region
      %68 = dma.done [#allocation5], 128
    $region25: #{tpu_custom_call.1} parent=1 // pred_fallthru
      _
    // Predicated region
    $region26: #{tpu_custom_call.1} parent=1 // pred_check
      _
    $region27: #{tpu_custom_call.1} parent=1 // pred_check_branch
      %70 = sbr.rel (0) target = $region29
    $region28: #{tpu_custom_call.1} parent=1 // pred_region
      %71 = dma.done [#allocation8], 1024
    $region29: #{tpu_custom_call.1} parent=1 // pred_fallthru
      _
    // Predicated region
    $region30: #{tpu_custom_call.1} parent=1 // pred_check
      _
    $region31: #{tpu_custom_call.1} parent=1 // pred_check_branch
      %73 = sbr.rel (0) target = $region33
    $region32: #{tpu_custom_call.1} parent=1 // pred_region
      %74 = dma.done [#allocation8], 1024
    $region33: #{tpu_custom_call.1} parent=1 // pred_fallthru
      _
    // Predicated region
    $region34: #{tpu_custom_call.1} parent=1 // pred_check
      _
    $region35: #{tpu_custom_call.1} parent=1 // pred_check_branch
      %76 = sbr.rel (0) target = $region37
    $region36: #{tpu_custom_call.1} parent=1 // pred_region
      %77 = dma.done [#allocation11], 1024
    $region37: #{tpu_custom_call.1} parent=1 // pred_fallthru
      _
    %s79 = sld [smem:[#allocation3]]
    %v80 = vlaneseq
    %v81 = vshrl.u32 %v80, 7
    %v82 = vadd.s32 %v81, 8
    %v83 = vlaneseq
    %v84 = vand.u32 %v83, 127
    %s85 = smul.u32 %s79, 2246822507
    %s86 = smul.u32 0, 3266489909
    %s87 = sadd.s32 %s85, %s86
    %v88 = vmul.u32 %v81, 668265263
    %v89 = vmul.u32 %v82, 668265263
    %v90 = vstv %s87
    %v91 = vadd.s32 %v90, %v88
    %v92 = vadd.s32 %v90, %v89
    %v93 = vmul.u32 %v84, 374761393
    %v94 = vadd.s32 %v91, %v93
    %v95 = vadd.s32 %v92, %v93
    %v96 = vshrl.u32 %v94, 16
    %v97 = vshrl.u32 %v95, 16
    %v98 = vxor.u32 %v94, %v96
    %v99 = vxor.u32 %v95, %v97
    %v100 = vmul.u32 %v98, 2246822507
    %v101 = vmul.u32 %v99, 2246822507
    %v102 = vshrl.u32 %v100, 13
    %v103 = vshrl.u32 %v101, 13
    %v104 = vxor.u32 %v100, %v102
    %v105 = vxor.u32 %v101, %v103
    %v106 = vmul.u32 %v104, 3266489909
    %v107 = vmul.u32 %v105, 3266489909
    %v108 = vshrl.u32 %v106, 16
    %v109 = vshrl.u32 %v107, 16
    %v110 = vxor.u32 %v106, %v108
    %v111 = vxor.u32 %v107, %v109
    %v112 = vld [vmem:[#allocation4] sm:$0xf]
    %v113 = vld [vmem:[#allocation4 + $0x4] sm:$0xf]
    %v114 = vld [vmem:[#allocation7] sm:$0xf]
    %v115 = vld [vmem:[#allocation7 + $0x4] sm:$0xf]
    %v116 = vld [vmem:[#allocation7 + $0x8] sm:$0xf]
    %v117 = vld [vmem:[#allocation7 + $0xc] sm:$0xf]
    %v118 = vld [vmem:[#allocation7 + $0x10] sm:$0xf]
    %v119 = vld [vmem:[#allocation7 + $0x14] sm:$0xf]
    %v120 = vld [vmem:[#allocation7 + $0x18] sm:$0xf]
    %v121 = vld [vmem:[#allocation7 + $0x1c] sm:$0xf]
    %v122 = vld [vmem:[#allocation7 + $0x20] sm:$0xf]
    %v123 = vld [vmem:[#allocation7 + $0x24] sm:$0xf]
    %v124 = vld [vmem:[#allocation7 + $0x28] sm:$0xf]
    %v125 = vld [vmem:[#allocation7 + $0x2c] sm:$0xf]
    %v126 = vld [vmem:[#allocation7 + $0x30] sm:$0xf]
    %v127 = vld [vmem:[#allocation7 + $0x34] sm:$0xf]
    %v128 = vld [vmem:[#allocation7 + $0x38] sm:$0xf]
    %v129 = vld [vmem:[#allocation7 + $0x3c] sm:$0xf]
    %v130 = vld [vmem:[%s5] sm:$0x1]
    %v131 = vlaneseq
    %v132 = vshrl.u32 %v131, 7
    %v133 = vsub.s32 0, %v132
    %v134 = vrot.slane %v130, %v133
    %v137 = vunpack.c.l.b16 %v112
    %v138 = vunpack.c.l.b16 %v113
    %v139 = vpack.c.b16 %v138, %v137
    %v157 = vunpack.c.l.b16 %v114
    %v158 = vunpack.c.l.b16 %v115
    %v159 = vunpack.c.l.b16 %v116
    %v160 = vunpack.c.l.b16 %v117
    %v161 = vunpack.c.l.b16 %v118
    %v162 = vunpack.c.l.b16 %v119
    %v163 = vunpack.c.l.b16 %v120
    %v164 = vunpack.c.l.b16 %v121
    %v165 = vunpack.c.l.b16 %v122
    %v166 = vunpack.c.l.b16 %v123
    %v167 = vunpack.c.l.b16 %v124
    %v168 = vunpack.c.l.b16 %v125
    %v169 = vunpack.c.l.b16 %v126
    %v170 = vunpack.c.l.b16 %v127
    %v171 = vunpack.c.l.b16 %v128
    %v172 = vunpack.c.l.b16 %v129
    %v173 = vpack.c.b16 %v158, %v157
    %v174 = vpack.c.b16 %v160, %v159
    %v175 = vpack.c.b16 %v162, %v161
    %v176 = vpack.c.b16 %v164, %v163
    %v177 = vpack.c.b16 %v166, %v165
    %v178 = vpack.c.b16 %v168, %v167
    %v179 = vpack.c.b16 %v170, %v169
    %v180 = vpack.c.b16 %v172, %v171
    %189 = vmatprep.subr.bf16.mxu0 0
    %190 = vmatpush1.bf16.msra.mxu0 %v173
    %191 = vmatprep.subr.bf16.mxu0 0
    %192 = vmatpush1.bf16.msra.mxu0 %v174
    %193 = vmatprep.subr.bf16.mxu0 0
    %194 = vmatpush1.bf16.msra.mxu0 %v175
    %195 = vmatprep.subr.bf16.mxu0 0
    %196 = vmatpush1.bf16.msra.mxu0 %v176
    %197 = vmatprep.subr.bf16.mxu0 0
    %198 = vmatpush1.bf16.msra.mxu0 %v177
    %199 = vmatprep.subr.bf16.mxu0 0
    %200 = vmatpush1.bf16.msra.mxu0 %v178
    %201 = vmatprep.subr.bf16.mxu0 0
    %202 = vmatpush1.bf16.msra.mxu0 %v179
    %203 = vmatprep.subr.bf16.mxu0 0
    %204 = vmatpush1.bf16.msra.mxu0 %v180
    %205 = vmatprep.subr.bf16.mxu0 0
    %206 = vmatpush1.bf16.msra.mxu0 0
    %207 = vmatprep.subr.bf16.mxu0 0
    %208 = vmatpush1.bf16.msra.mxu0 0
    %209 = vmatprep.subr.bf16.mxu0 0
    %210 = vmatpush1.bf16.msra.mxu0 0
    %211 = vmatprep.subr.bf16.mxu0 0
    %212 = vmatpush1.bf16.msra.mxu0 0
    %213 = vmatprep.subr.bf16.mxu0 0
    %214 = vmatpush1.bf16.msra.mxu0 0
    %215 = vmatprep.subr.bf16.mxu0 0
    %216 = vmatpush1.bf16.msra.mxu0 0
    %217 = vmatprep.subr.bf16.mxu0 0
    %218 = vmatpush1.bf16.msra.mxu0 0
    %219 = vmatprep.subr.bf16.mxu0 0
    %220 = vmatpush1.bf16.msra.mxu0 0
    %221 = vmatprep.mubr.bf16.mxu0 0
    %222 = vmatmul.mubr.bf16.gmra.mrb[0].mxu0 %v139
    %v223 = vpop.f32.mrb[0].mxu0
    %v224 = vadd.f32 %v134, %v223
    %v225 = vpop.f32.mrb[0].mxu0
    %v226 = vpop.f32.mrb[0].mxu0
    %v227 = vadd.f32 %v134, %v226
    %v228 = vpop.f32.mrb[0].mxu0
    %229 = vdwg.mxu0
    %v230 = vand.u32 %v110, 1
    %v231 = vand.u32 %v111, 1
    %vm232 = vcmp.eq.s32.totalorder %v230, 0
    %vm233 = vcmp.eq.s32.totalorder %v231, 0
    %vm234 = vcmp.gt.f32.partialorder %v224, 0.0
    %vm235 = vcmp.gt.f32.partialorder %v227, 0.0
    %vm236 = vmand %vm234, %vm232
    %vm237 = vmand %vm235, %vm233
    %v238 = vmul.f32 %v224, 2.0
    %v239 = vmul.f32 %v227, 2.0
    %v240 = vsel %vm236, %v238, 0.0
    %v241 = vsel %vm237, %v239, 0.0
    %v242 = vpack.c.bf16 %v241, %v240
    %v243 = vld [vmem:[#allocation9] sm:$0xf]
    %v244 = vld [vmem:[#allocation9 + $0x4] sm:$0xf]
    %v245 = vld [vmem:[#allocation9 + $0x8] sm:$0xf]
    %v246 = vld [vmem:[#allocation9 + $0xc] sm:$0xf]
    %v247 = vld [vmem:[#allocation9 + $0x10] sm:$0xf]
    %v248 = vld [vmem:[#allocation9 + $0x14] sm:$0xf]
    %v249 = vld [vmem:[#allocation9 + $0x18] sm:$0xf]
    %v250 = vld [vmem:[#allocation9 + $0x1c] sm:$0xf]
    %v251 = vld [vmem:[#allocation9 + $0x20] sm:$0xf]
    %v252 = vld [vmem:[#allocation9 + $0x24] sm:$0xf]
    %v253 = vld [vmem:[#allocation9 + $0x28] sm:$0xf]
    %v254 = vld [vmem:[#allocation9 + $0x2c] sm:$0xf]
    %v255 = vld [vmem:[#allocation9 + $0x30] sm:$0xf]
    %v256 = vld [vmem:[#allocation9 + $0x34] sm:$0xf]
    %v257 = vld [vmem:[#allocation9 + $0x38] sm:$0xf]
    %v258 = vld [vmem:[#allocation9 + $0x3c] sm:$0xf]
    %v259 = vld [vmem:[%s5 + $0x1] sm:$0x1]
    %v260 = vlaneseq
    %v261 = vshrl.u32 %v260, 7
    %v262 = vsub.s32 0, %v261
    %v263 = vrot.slane %v259, %v262
    %v280 = vunpack.c.l.b16 %v243
    %v281 = vunpack.c.l.b16 %v244
    %v282 = vunpack.c.l.b16 %v245
    %v283 = vunpack.c.l.b16 %v246
    %v284 = vunpack.c.l.b16 %v247
    %v285 = vunpack.c.l.b16 %v248
    %v286 = vunpack.c.l.b16 %v249
    %v287 = vunpack.c.l.b16 %v250
    %v288 = vunpack.c.l.b16 %v251
    %v289 = vunpack.c.l.b16 %v252
    %v290 = vunpack.c.l.b16 %v253
    %v291 = vunpack.c.l.b16 %v254
    %v292 = vunpack.c.l.b16 %v255
    %v293 = vunpack.c.l.b16 %v256
    %v294 = vunpack.c.l.b16 %v257
    %v295 = vunpack.c.l.b16 %v258
    %v296 = vpack.c.b16 %v281, %v280
    %v297 = vpack.c.b16 %v283, %v282
    %v298 = vpack.c.b16 %v285, %v284
    %v299 = vpack.c.b16 %v287, %v286
    %v300 = vpack.c.b16 %v289, %v288
    %v301 = vpack.c.b16 %v291, %v290
    %v302 = vpack.c.b16 %v293, %v292
    %v303 = vpack.c.b16 %v295, %v294
    %312 = vmatprep.subr.bf16.mxu0 0
    %313 = vmatpush1.bf16.msra.mxu0 %v296
    %314 = vmatprep.subr.bf16.mxu0 0
    %315 = vmatpush1.bf16.msra.mxu0 %v297
    %316 = vmatprep.subr.bf16.mxu0 0
    %317 = vmatpush1.bf16.msra.mxu0 %v298
    %318 = vmatprep.subr.bf16.mxu0 0
    %319 = vmatpush1.bf16.msra.mxu0 %v299
    %320 = vmatprep.subr.bf16.mxu0 0
    %321 = vmatpush1.bf16.msra.mxu0 %v300
    %322 = vmatprep.subr.bf16.mxu0 0
    %323 = vmatpush1.bf16.msra.mxu0 %v301
    %324 = vmatprep.subr.bf16.mxu0 0
    %325 = vmatpush1.bf16.msra.mxu0 %v302
    %326 = vmatprep.subr.bf16.mxu0 0
    %327 = vmatpush1.bf16.msra.mxu0 %v303
    %328 = vmatprep.subr.bf16.mxu0 0
    %329 = vmatpush1.bf16.msra.mxu0 0
    %330 = vmatprep.subr.bf16.mxu0 0
    %331 = vmatpush1.bf16.msra.mxu0 0
    %332 = vmatprep.subr.bf16.mxu0 0
    %333 = vmatpush1.bf16.msra.mxu0 0
    %334 = vmatprep.subr.bf16.mxu0 0
    %335 = vmatpush1.bf16.msra.mxu0 0
    %336 = vmatprep.subr.bf16.mxu0 0
    %337 = vmatpush1.bf16.msra.mxu0 0
    %338 = vmatprep.subr.bf16.mxu0 0
    %339 = vmatpush1.bf16.msra.mxu0 0
    %340 = vmatprep.subr.bf16.mxu0 0
    %341 = vmatpush1.bf16.msra.mxu0 0
    %342 = vmatprep.subr.bf16.mxu0 0
    %343 = vmatpush1.bf16.msra.mxu0 0
    %344 = vmatprep.mubr.bf16.mxu0 0
    %345 = vmatmul.mubr.bf16.gmra.mrb[0].mxu0 %v242
    %v346 = vpop.f32.mrb[0].mxu0
    %v347 = vadd.f32 %v263, %v346
    %v348 = vpop.f32.mrb[0].mxu0
    %v349 = vpop.f32.mrb[0].mxu0
    %v350 = vadd.f32 %v263, %v349
    %v351 = vpop.f32.mrb[0].mxu0
    %352 = vdwg.mxu0
    %v353 = vshrl.u32 %v110, 1
    %v354 = vshrl.u32 %v111, 1
    %v355 = vand.u32 %v353, 1
    %v356 = vand.u32 %v354, 1
    %vm357 = vcmp.eq.s32.totalorder %v355, 0
    %vm358 = vcmp.eq.s32.totalorder %v356, 0
    %vm359 = vcmp.gt.f32.partialorder %v347, 0.0
    %vm360 = vcmp.gt.f32.partialorder %v350, 0.0
    %vm361 = vmand %vm359, %vm357
    %vm362 = vmand %vm360, %vm358
    %v363 = vmul.f32 %v347, 2.0
    %v364 = vmul.f32 %v350, 2.0
    %v365 = vsel %vm361, %v363, 0.0
    %v366 = vsel %vm362, %v364, 0.0
    %v367 = vpack.c.bf16 %v366, %v365
    %v368 = vld [vmem:[#allocation10] sm:$0xf]
    %v369 = vld [vmem:[#allocation10 + $0x4] sm:$0xf]
    %v370 = vld [vmem:[#allocation10 + $0x8] sm:$0xf]
    %v371 = vld [vmem:[#allocation10 + $0xc] sm:$0xf]
    %v372 = vld [vmem:[#allocation10 + $0x10] sm:$0xf]
    %v373 = vld [vmem:[#allocation10 + $0x14] sm:$0xf]
    %v374 = vld [vmem:[#allocation10 + $0x18] sm:$0xf]
    %v375 = vld [vmem:[#allocation10 + $0x1c] sm:$0xf]
    %v376 = vld [vmem:[#allocation10 + $0x20] sm:$0xf]
    %v377 = vld [vmem:[#allocation10 + $0x24] sm:$0xf]
    %v378 = vld [vmem:[#allocation10 + $0x28] sm:$0xf]
    %v379 = vld [vmem:[#allocation10 + $0x2c] sm:$0xf]
    %v380 = vld [vmem:[#allocation10 + $0x30] sm:$0xf]
    %v381 = vld [vmem:[#allocation10 + $0x34] sm:$0xf]
    %v382 = vld [vmem:[#allocation10 + $0x38] sm:$0xf]
    %v383 = vld [vmem:[#allocation10 + $0x3c] sm:$0xf]
    %v384 = vld [vmem:[%s5 + $0x2] sm:$0x1]
    %v385 = vlaneseq
    %v386 = vshrl.u32 %v385, 7
    %v387 = vsub.s32 0, %v386
    %v388 = vrot.slane %v384, %v387
    %v405 = vunpack.c.l.b16 %v368
    %v406 = vunpack.c.l.b16 %v369
    %v407 = vunpack.c.l.b16 %v370
    %v408 = vunpack.c.l.b16 %v371
    %v409 = vunpack.c.l.b16 %v372
    %v410 = vunpack.c.l.b16 %v373
    %v411 = vunpack.c.l.b16 %v374
    %v412 = vunpack.c.l.b16 %v375
    %v413 = vunpack.c.l.b16 %v376
    %v414 = vunpack.c.l.b16 %v377
    %v415 = vunpack.c.l.b16 %v378
    %v416 = vunpack.c.l.b16 %v379
    %v417 = vunpack.c.l.b16 %v380
    %v418 = vunpack.c.l.b16 %v381
    %v419 = vunpack.c.l.b16 %v382
    %v420 = vunpack.c.l.b16 %v383
    %v421 = vpack.c.b16 %v406, %v405
    %v422 = vpack.c.b16 %v408, %v407
    %v423 = vpack.c.b16 %v410, %v409
    %v424 = vpack.c.b16 %v412, %v411
    %v425 = vpack.c.b16 %v414, %v413
    %v426 = vpack.c.b16 %v416, %v415
    %v427 = vpack.c.b16 %v418, %v417
    %v428 = vpack.c.b16 %v420, %v419
    %437 = vmatprep.subr.bf16.mxu0 0
    %438 = vmatpush1.bf16.msra.mxu0 %v421
    %439 = vmatprep.subr.bf16.mxu0 0
    %440 = vmatpush1.bf16.msra.mxu0 %v422
    %441 = vmatprep.subr.bf16.mxu0 0
    %442 = vmatpush1.bf16.msra.mxu0 %v423
    %443 = vmatprep.subr.bf16.mxu0 0
    %444 = vmatpush1.bf16.msra.mxu0 %v424
    %445 = vmatprep.subr.bf16.mxu0 0
    %446 = vmatpush1.bf16.msra.mxu0 %v425
    %447 = vmatprep.subr.bf16.mxu0 0
    %448 = vmatpush1.bf16.msra.mxu0 %v426
    %449 = vmatprep.subr.bf16.mxu0 0
    %450 = vmatpush1.bf16.msra.mxu0 %v427
    %451 = vmatprep.subr.bf16.mxu0 0
    %452 = vmatpush1.bf16.msra.mxu0 %v428
    %453 = vmatprep.subr.bf16.mxu0 0
    %454 = vmatpush1.bf16.msra.mxu0 0
    %455 = vmatprep.subr.bf16.mxu0 0
    %456 = vmatpush1.bf16.msra.mxu0 0
    %457 = vmatprep.subr.bf16.mxu0 0
    %458 = vmatpush1.bf16.msra.mxu0 0
    %459 = vmatprep.subr.bf16.mxu0 0
    %460 = vmatpush1.bf16.msra.mxu0 0
    %461 = vmatprep.subr.bf16.mxu0 0
    %462 = vmatpush1.bf16.msra.mxu0 0
    %463 = vmatprep.subr.bf16.mxu0 0
    %464 = vmatpush1.bf16.msra.mxu0 0
    %465 = vmatprep.subr.bf16.mxu0 0
    %466 = vmatpush1.bf16.msra.mxu0 0
    %467 = vmatprep.subr.bf16.mxu0 0
    %468 = vmatpush1.bf16.msra.mxu0 0
    %469 = vmatprep.mubr.bf16.mxu0 0
    %470 = vmatmul.mubr.bf16.gmra.mrb[0].mxu0 %v367
    %v471 = vpop.f32.mrb[0].mxu0
    %v472 = vadd.f32 %v388, %v471
    %v473 = vpop.f32.mrb[0].mxu0
    %v474 = vpop.f32.mrb[0].mxu0
    %v475 = vadd.f32 %v388, %v474
    %v476 = vpop.f32.mrb[0].mxu0
    %477 = vdwg.mxu0
    %478 = vst [vmem:[#allocation12] sm:$0xff] %v472
    %479 = vst [vmem:[#allocation12 + $0x8] sm:$0xff] %v475
    // Predicated region
    $region38: #{tpu_custom_call.1} parent=1 // pred_check
      _
    $region39: #{tpu_custom_call.1} parent=1 // pred_check_branch
      %481 = sbr.rel (0) target = $region41
    $region40: #{tpu_custom_call.1} parent=1 // pred_region
      %s483 = ssub.s32 256, 256
      %484 = vsyncadd [#allocation6], %s483
      %s485 = sshll.u32 [#allocation12], 4
      %s486 = int_to_ptr.vmem [resolvable:$true] %s485
      %491 = dma.vmem_to_hbm [thread:$0]  %s486, 256, %s6, [#allocation6], 128, 128, 8
    $region41: #{tpu_custom_call.1} parent=1 // pred_fallthru
      _
    // Predicated region
    $region42: #{tpu_custom_call.1} parent=1 // pred_check
      _
    $region43: #{tpu_custom_call.1} parent=1 // pred_check_branch
      %493 = sbr.rel (0) target = $region45
    $region44: #{tpu_custom_call.1} parent=1 // pred_region
      %494 = dma.done [#allocation6], 256
    $region45: #{tpu_custom_call.1} parent=1 // pred_fallthru
      _
    %495 = vsyncpa [#allocation5], 1
    %496 = vsyncpa [#allocation8], 1
    %497 = vsyncpa [#allocation11], 1
    %498 = vsyncpa [#allocation6], 1

</llo_original>
